<compile_context>
chip_gen: v7x
topology: tpu7x:2x2x1
jax: 0.10.0
libtpu: 0.0.40
codegen_flags: <defaults>
</compile_context>

<pallas_src>
import functools

import jax
import jax.numpy as jnp
from jax.experimental import pallas as pl
from jax.experimental.pallas import tpu as pltpu

_INV_SQRT2 = 0.7071067811865476


def _round_up(x, m):
    return ((x + m - 1) // m) * m


def _vmem_capacity_bytes():
    try:
        return int(pltpu.get_tpu_info().vmem_capacity_bytes)
    except Exception:
        return 64 << 20  # conservative fallback (v7x per-TC VMEM)


def _mlp_kernel(x_ref, w1_ref, b1_ref, w2_ref, b2_ref, o_ref, acc_ref, *,
                compute_dtype, approximate_gelu):
    # Grid: (token tiles, hidden blocks).  The hidden axis is a reduction:
    # acc_ref accumulates fc2 partial products across H blocks.
    # x_ref:  (tm, Cin_p)      token tile (native dtype, cast in-kernel)
    # w1_ref: (Cin_p, H_blk)   fc1 weight block (compute dtype)
    # b1_ref: (1, H_blk)       fc1 bias block (f32)
    # w2_ref: (H_blk, Cout_p)  fc2 weight block (compute dtype)
    # b2_ref: (1, Cout_p)      fc2 bias (f32)
    # o_ref:  (tm, Cout_p)     output tile
    # acc_ref:(tm, Cout_p)     f32 accumulator scratch
    h_idx = pl.program_id(1)

    @pl.when(h_idx == 0)
    def _():
        acc_ref[...] = jnp.zeros_like(acc_ref)

    # In-kernel cast of the activation tile (x stays f32 in HBM).
    x = x_ref[...].astype(compute_dtype)

    # fc1 on the MXU (f32 accumulation) + bias
    h = jnp.dot(x, w1_ref[...], preferred_element_type=jnp.float32)
    h = h + b1_ref[...]

    # GELU
    if approximate_gelu:
        # tanh formulation: uses the otherwise-idle EUP slot (v6e/v7x win),
        # ~1e-3 level deviation from nn.GELU()'s erf default.
        h = jax.nn.gelu(h, approximate=True)
    else:
        # exact erf formulation — matches nn.GELU() default
        h = 0.5 * h * (1.0 + jax.lax.erf(h * _INV_SQRT2))

    # dropout(p=0.0) is identity
    # TODO(synk): add PRNG-based dropout (pltpu.prng_seed / prng_random_bits) if drop > 0.

    # fc2 partial product on the MXU, accumulate in f32
    acc_ref[...] += jnp.dot(h.astype(compute_dtype), w2_ref[...],
                            preferred_element_type=jnp.float32)

    @pl.when(h_idx == pl.num_programs(1) - 1)
    def _():
        o_ref[...] = (acc_ref[...] + b2_ref[...]).astype(o_ref.dtype)


@functools.partial(
    jax.jit,
    static_argnames=("tm", "compute_dtype", "out_dtype", "approximate_gelu"))
def mlp_pallas(x, w1, b1, w2, b2, *, tm=None, compute_dtype=jnp.bfloat16,
               out_dtype=None, approximate_gelu=False):
    """x: [B, S, C_in].  w1:[C_in,H] b1:[H] w2:[H,C_out] b2:[C_out].
    Returns [B, S, C_out] in `out_dtype` (default: x.dtype)."""
    B, S, C_in = x.shape
    H = w1.shape[1]
    C_out = w2.shape[1]
    M = B * S
    out_dtype = x.dtype if out_dtype is None else jnp.dtype(out_dtype)

    cbytes = jnp.dtype(compute_dtype).itemsize
    xbytes = jnp.dtype(x.dtype).itemsize
    obytes = jnp.dtype(out_dtype).itemsize

    vmem_cap = _vmem_capacity_bytes()

    # --- chip-aware default token tile; balanced so a ragged M never pads up
    # to a whole extra tile ---
    if tm is None:
        tm = 512 if vmem_cap >= (100 << 20) else 256
    num_m_tiles = max(1, pl.cdiv(M, tm))
    tm_eff = _round_up(pl.cdiv(M, num_m_tiles), 8)
    M_pad = num_m_tiles * tm_eff

    # --- lane-dense feature padding (multiples of 128) ---
    C_in_p = _round_up(C_in, 128)
    H_p = _round_up(H, 128)
    C_out_p = _round_up(C_out, 128)

    # --- resident weights vs. streaming over H ---
    weight_bytes = (C_in_p * H_p + H_p * C_out_p) * cbytes
    resident_thresh = min(40 << 20, int(0.45 * vmem_cap))
    if weight_bytes <= resident_thresh:
        H_blk = H_p                          # fully VMEM-resident, single H step
    else:
        per_col = (C_in_p + C_out_p) * cbytes
        H_blk = max(128, ((8 << 20) // per_col) // 128 * 128)  # ~8 MiB / block
        H_blk = min(H_blk, H_p)
    H_pad = _round_up(H_p, H_blk)
    n_h = H_pad // H_blk
    resident = (n_h == 1)

    # --- pad operands (zero padding is numerically safe: GELU(0)=0 and padded
    # weight rows/cols are zero) ---
    x2d = jnp.pad(x.reshape(M, C_in), ((0, M_pad - M), (0, C_in_p - C_in)))
    w1_p = jnp.pad(w1, ((0, C_in_p - C_in), (0, H_pad - H))).astype(compute_dtype)
    w2_p = jnp.pad(w2, ((0, H_pad - H), (0, C_out_p - C_out))).astype(compute_dtype)
    b1_p = jnp.pad(b1, (0, H_pad - H)).reshape(1, H_pad).astype(jnp.float32)
    b2_p = jnp.pad(b2, (0, C_out_p - C_out)).reshape(1, C_out_p).astype(jnp.float32)

    # --- cost estimate ---
    flops = 2 * M_pad * (C_in_p * H_pad + H_pad * C_out_p)
    w_reads = 1 if resident else num_m_tiles   # streamed weights re-read per M tile
    bytes_accessed = (
        M_pad * C_in_p * xbytes
        + w_reads * (C_in_p * H_pad + H_pad * C_out_p) * cbytes
        + (H_pad + C_out_p) * 4
        + M_pad * C_out_p * obytes
    )
    cost = pl.CostEstimate(flops=int(flops),
                           transcendentals=int(M_pad * H_pad),
                           bytes_accessed=int(bytes_accessed))

    # --- generation-aware VMEM accounting ---
    w_bufs = 1 if resident else 2   # Buffered(1) when the index map is constant
    vmem_need = (
        2 * tm_eff * C_in_p * xbytes                               # x tiles
        + 2 * tm_eff * C_out_p * obytes                            # out tiles
        + w_bufs * (C_in_p * H_blk + H_blk * C_out_p) * cbytes     # w1/w2 blocks
        + w_bufs * H_blk * 4 + C_out_p * 4                         # b1 blocks, b2
        + tm_eff * C_out_p * 4                                     # f32 accumulator
        + tm_eff * H_blk * 4                                       # f32 hidden temp
    )
    vmem_limit = None
    if vmem_need > (16 << 20):   # 16 MiB = smallest default scoped limit (v5e)
        vmem_limit = int(min(vmem_need * 5 // 4, int(0.75 * vmem_cap)))

    # --- BlockSpecs ---
    def _const_spec(shape, imap):
        # constant index map -> nothing to double-buffer; halve its VMEM.
        return pl.BlockSpec(shape, imap, pipeline_mode=pl.Buffered(1))

    if resident:
        w1_spec = _const_spec((C_in_p, H_blk), lambda i, h: (0, 0))
        b1_spec = _const_spec((1, H_blk), lambda i, h: (0, 0))
        w2_spec = _const_spec((H_blk, C_out_p), lambda i, h: (0, 0))
    else:
        w1_spec = pl.BlockSpec((C_in_p, H_blk), lambda i, h: (0, h))
        b1_spec = pl.BlockSpec((1, H_blk), lambda i, h: (0, h))
        w2_spec = pl.BlockSpec((H_blk, C_out_p), lambda i, h: (h, 0))
    b2_spec = _const_spec((1, C_out_p), lambda i, h: (0, 0))

    kernel = functools.partial(_mlp_kernel,
                               compute_dtype=compute_dtype,
                               approximate_gelu=approximate_gelu)

    out = pl.pallas_call(
        kernel,
        out_shape=jax.ShapeDtypeStruct((M_pad, C_out_p), out_dtype),
        grid_spec=pltpu.PrefetchScalarGridSpec(
            num_scalar_prefetch=0,
            grid=(num_m_tiles, n_h),
            in_specs=[
                pl.BlockSpec((tm_eff, C_in_p), lambda i, h: (i, 0)),   # x tile
                w1_spec, b1_spec, w2_spec, b2_spec,
            ],
            out_specs=pl.BlockSpec((tm_eff, C_out_p), lambda i, h: (i, 0)),
            scratch_shapes=[pltpu.VMEM((tm_eff, C_out_p), jnp.float32)],
        ),
        compiler_params=pltpu.CompilerParams(
            dimension_semantics=("parallel", "arbitrary"),
            vmem_limit_bytes=vmem_limit,
        ),
        cost_estimate=cost,
    )(x2d, w1_p, b1_p, w2_p, b2_p)

    return out[:M, :C_out].reshape(B, S, C_out)


def init_mlp_params(key, in_features, hidden_features, out_features):
    """Deterministic parameter init (shapes match nn.Linear, stored transposed)."""
    k1, k2, k3, k4 = jax.random.split(key, 4)
    # stored as [in, hidden] / [hidden, out] for direct x @ W use
    w1 = jax.random.normal(k1, (in_features, hidden_features), jnp.float32) * 0.02
    b1 = jax.random.normal(k2, (hidden_features,), jnp.float32) * 0.02
    w2 = jax.random.normal(k3, (hidden_features, out_features), jnp.float32) * 0.02
    b2 = jax.random.normal(k4, (out_features,), jnp.float32) * 0.02
    return w1, b1, w2, b2


if __name__ == "__main__":
    key = jax.random.PRNGKey(0)
    kx, kp = jax.random.split(key)

    B, S = 2, 8
    in_features, hidden_features, out_features = 32, 64, 32

    x = jax.random.normal(kx, (B, S, in_features), jnp.float32)
    w1, b1, w2, b2 = init_mlp_params(kp, in_features, hidden_features, out_features)

    y = mlp_pallas(x, w1, b1, w2, b2)
    jax.block_until_ready(y)
    assert y.shape == (B, S, out_features)

    # sanity check vs pure-JAX f32 reference (tolerance covers bf16 MXU inputs;
    # accumulation / bias / GELU are f32 in the kernel, exact erf GELU default)
    h_ref = x @ w1 + b1
    h_ref = jax.nn.gelu(h_ref, approximate=False)
    y_ref = h_ref @ w2 + b2
    assert jnp.allclose(y.astype(jnp.float32), y_ref, atol=5e-3, rtol=5e-2), \
        "mismatch vs reference"

    print("KERNEL_OK")
</pallas_src>

<mosaic_0001>
module attributes {stable_mosaic.version = 11 : i64} {
  func.func @_mlp_kernel(%arg0: i32, %arg1: i32, %arg2: memref<16x128xf32, #tpu.memory_space<vmem>>, %arg3: memref<128x128xbf16, #tpu.memory_space<vmem>>, %arg4: memref<1x128xf32, #tpu.memory_space<vmem>>, %arg5: memref<128x128xbf16, #tpu.memory_space<vmem>>, %arg6: memref<1x128xf32, #tpu.memory_space<vmem>>, %arg7: memref<16x128xf32, #tpu.memory_space<vmem>>, %arg8: memref<16x128xf32, #tpu.memory_space<vmem>>) attributes {dimension_semantics = [#tpu.dimension_semantics<parallel>, #tpu.dimension_semantics<arbitrary>], iteration_bounds = array<i64: 1, 1>, scalar_prefetch = 0 : i64, scratch_operands = 1 : i64, tpu.core_type = #tpu.core_type<tc>, window_params = [{transform_indices = @transform_0, window_bounds = array<i64: 16, 128>}, {pipeline_mode = #tpu.pipeline_mode<synchronous>, transform_indices = @transform_1, window_bounds = array<i64: 128, 128>}, {pipeline_mode = #tpu.pipeline_mode<synchronous>, transform_indices = @transform_2, window_bounds = array<i64: 1, 128>}, {pipeline_mode = #tpu.pipeline_mode<synchronous>, transform_indices = @transform_3, window_bounds = array<i64: 128, 128>}, {pipeline_mode = #tpu.pipeline_mode<synchronous>, transform_indices = @transform_4, window_bounds = array<i64: 1, 128>}, {transform_indices = @transform_5, window_bounds = array<i64: 16, 128>}]} {
    %c0_i32 = arith.constant 0 : i32
    %0 = arith.cmpi eq, %arg1, %c0_i32 : i32
    %1 = arith.extui %0 : i1 to i32
    %c0_i32_0 = arith.constant 0 : i32
    %2 = arith.cmpi ne, %1, %c0_i32_0 : i32
    scf.if %2 {
      %cst_18 = arith.constant 0.000000e+00 : f32
      %27 = vector.broadcast %cst_18 : f32 to vector<16x128xf32>
      %c0_19 = arith.constant 0 : index
      %c0_20 = arith.constant 0 : index
      %28 = vector.load %arg8[%c0_19, %c0_20] : memref<16x128xf32, #tpu.memory_space<vmem>>, vector<16x128xf32>
      tpu.vector_store %arg8[%c0_19, %c0_20], %27 {strides = array<i32>} : memref<16x128xf32, #tpu.memory_space<vmem>>, vector<16x128xf32>,
    } else {
    }
    %c0 = arith.constant 0 : index
    %c0_1 = arith.constant 0 : index
    %3 = vector.load %arg2[%c0, %c0_1] : memref<16x128xf32, #tpu.memory_space<vmem>>, vector<16x128xf32>
    %4 = arith.truncf %3 : vector<16x128xf32> to vector<16x128xbf16>
    %c0_2 = arith.constant 0 : index
    %c0_3 = arith.constant 0 : index
    %5 = vector.load %arg3[%c0_2, %c0_3] : memref<128x128xbf16, #tpu.memory_space<vmem>>, vector<128x128xbf16>
    %cst = arith.constant dense<0.000000e+00> : vector<16x128xf32>
    %6 = tpu.matmul %4, %5, %cst {dimension_numbers = #tpu.dot_dimension_numbers<[1], [0], [0], [1], [0, 0, 1, 1], [], []>} : vector<16x128xbf16>, vector<128x128xbf16>, vector<16x128xf32> -> vector<16x128xf32>
    %c0_4 = arith.constant 0 : index
    %c0_5 = arith.constant 0 : index
    %7 = vector.load %arg4[%c0_4, %c0_5] : memref<1x128xf32, #tpu.memory_space<vmem>>, vector<1x128xf32>
    %8 = vector.broadcast %7 : vector<1x128xf32> to vector<16x128xf32>
    %9 = arith.addf %6, %8 : vector<16x128xf32>
    %cst_6 = arith.constant 5.000000e-01 : f32
    %10 = vector.broadcast %cst_6 : f32 to vector<16x128xf32>
    %11 = arith.mulf %10, %9 : vector<16x128xf32>
    %cst_7 = arith.constant 0.707106769 : f32
    %12 = vector.broadcast %cst_7 : f32 to vector<16x128xf32>
    %13 = arith.mulf %9, %12 : vector<16x128xf32>
    %14 = math.erf %13 : vector<16x128xf32>
    %cst_8 = arith.constant 1.000000e+00 : f32
    %15 = vector.broadcast %cst_8 : f32 to vector<16x128xf32>
    %16 = arith.addf %15, %14 : vector<16x128xf32>
    %17 = arith.mulf %11, %16 : vector<16x128xf32>
    %c0_9 = arith.constant 0 : index
    %c0_10 = arith.constant 0 : index
    %18 = vector.load %arg8[%c0_9, %c0_10] : memref<16x128xf32, #tpu.memory_space<vmem>>, vector<16x128xf32>
    %19 = arith.truncf %17 : vector<16x128xf32> to vector<16x128xbf16>
    %c0_11 = arith.constant 0 : index
    %c0_12 = arith.constant 0 : index
    %20 = vector.load %arg5[%c0_11, %c0_12] : memref<128x128xbf16, #tpu.memory_space<vmem>>, vector<128x128xbf16>
    %cst_13 = arith.constant dense<0.000000e+00> : vector<16x128xf32>
    %21 = tpu.matmul %19, %20, %cst_13 {dimension_numbers = #tpu.dot_dimension_numbers<[1], [0], [0], [1], [0, 0, 1, 1], [], []>} : vector<16x128xbf16>, vector<128x128xbf16>, vector<16x128xf32> -> vector<16x128xf32>
    %22 = arith.addf %18, %21 : vector<16x128xf32>
    %c0_14 = arith.constant 0 : index
    %c0_15 = arith.constant 0 : index
    %23 = vector.load %arg8[%c0_14, %c0_15] : memref<16x128xf32, #tpu.memory_space<vmem>>, vector<16x128xf32>
    tpu.vector_store %arg8[%c0_14, %c0_15], %22 {strides = array<i32>} : memref<16x128xf32, #tpu.memory_space<vmem>>, vector<16x128xf32>,
    %c0_i32_16 = arith.constant 0 : i32
    %24 = arith.cmpi eq, %arg1, %c0_i32_16 : i32
    %25 = arith.extui %24 : i1 to i32
    %c0_i32_17 = arith.constant 0 : i32
    %26 = arith.cmpi ne, %25, %c0_i32_17 : i32
    scf.if %26 {
      %c0_18 = arith.constant 0 : index
      %c0_19 = arith.constant 0 : index
      %27 = vector.load %arg8[%c0_18, %c0_19] : memref<16x128xf32, #tpu.memory_space<vmem>>, vector<16x128xf32>
      %c0_20 = arith.constant 0 : index
      %c0_21 = arith.constant 0 : index
      %28 = vector.load %arg6[%c0_20, %c0_21] : memref<1x128xf32, #tpu.memory_space<vmem>>, vector<1x128xf32>
      %29 = vector.broadcast %28 : vector<1x128xf32> to vector<16x128xf32>
      %30 = arith.addf %27, %29 : vector<16x128xf32>
      %c0_22 = arith.constant 0 : index
      %c0_23 = arith.constant 0 : index
      %31 = vector.load %arg7[%c0_22, %c0_23] : memref<16x128xf32, #tpu.memory_space<vmem>>, vector<16x128xf32>
      tpu.vector_store %arg7[%c0_22, %c0_23], %30 {strides = array<i32>} : memref<16x128xf32, #tpu.memory_space<vmem>>, vector<16x128xf32>,
    } else {
    }
    return
  }
  func.func @transform_0(%arg0: i32, %arg1: i32) -> (i32, i32) {
    %c0_i32 = arith.constant 0 : i32
    %c0_i32_0 = arith.constant 0 : i32
    return %arg0, %c0_i32 : i32, i32
  }
  func.func @transform_1(%arg0: i32, %arg1: i32) -> (i32, i32) {
    %c0_i32 = arith.constant 0 : i32
    %c0_i32_0 = arith.constant 0 : i32
    %c0_i32_1 = arith.constant 0 : i32
    return %c0_i32, %c0_i32_0 : i32, i32
  }
  func.func @transform_2(%arg0: i32, %arg1: i32) -> (i32, i32) {
    %c0_i32 = arith.constant 0 : i32
    %c0_i32_0 = arith.constant 0 : i32
    %c0_i32_1 = arith.constant 0 : i32
    return %c0_i32, %c0_i32_0 : i32, i32
  }
  func.func @transform_3(%arg0: i32, %arg1: i32) -> (i32, i32) {
    %c0_i32 = arith.constant 0 : i32
    %c0_i32_0 = arith.constant 0 : i32
    %c0_i32_1 = arith.constant 0 : i32
    return %c0_i32, %c0_i32_0 : i32, i32
  }
  func.func @transform_4(%arg0: i32, %arg1: i32) -> (i32, i32) {
    %c0_i32 = arith.constant 0 : i32
    %c0_i32_0 = arith.constant 0 : i32
    %c0_i32_1 = arith.constant 0 : i32
    return %c0_i32, %c0_i32_0 : i32, i32
  }
  func.func @transform_5(%arg0: i32, %arg1: i32) -> (i32, i32) {
    %c0_i32 = arith.constant 0 : i32
    %c0_i32_0 = arith.constant 0 : i32
    return %arg0, %c0_i32 : i32, i32
  }
}

</mosaic_0001>

<llo_original>
// kernel: mlp_pallas.1
$region0: #{mlp_pallas.1}
  #allocation0 [shape = 'u32[]', space=smem, size = 0x4, offset = 0x4, fixed_abs, tag = 'smem constant byte address 0x4 - core index']
  #allocation1 [shape = 'u32[144,128]{1,0:T(1,128)}', space=vmem, size = 0x12000, scoped, tag = 'internal scratch']
  #allocation2 [shape = 'f32[16,128]{1,0:T(8,128)}', space=vmem, size = 0x2000, scoped, tag = 'scratch operand']
  %s0 = inlined_call_operand.vmem [shape: f32[16,128], index: 0, kind: input, shape index: {}]
  %s1 = inlined_call_operand.vmem [shape: bf16[128,128], index: 1, kind: input, shape index: {}]
  %s2 = inlined_call_operand.vmem [shape: f32[1,128], index: 2, kind: input, shape index: {}]
  %s3 = inlined_call_operand.vmem [shape: bf16[128,128], index: 3, kind: input, shape index: {}]
  %s4 = inlined_call_operand.vmem [shape: f32[1,128], index: 4, kind: input, shape index: {}]
  %s5 = inlined_call_operand.vmem [shape: f32[16,128], index: 5, kind: output, shape index: {}]
  %s6 = sld [smem:[#allocation0]]
  $region38: #{mlp_pallas.1} parent=0
    _
  %s8 = ssub.s32 1, %s6
  %s9 = scalar_select 0, %s8, %s6
  // Predicated region
  $region2: #{mlp_pallas.1} parent=0 // pred_check
    _
  $region3: #{mlp_pallas.1} parent=0 // pred_check_branch
    %11 = sbr.rel (0) target = $region5
  $region4: #{mlp_pallas.1} parent=0 // pred_region
    _
  $region5: #{mlp_pallas.1} parent=0 // pred_fallthru
    _
  // Predicated region
  $region6: #{mlp_pallas.1} parent=0 // pred_check
    _
  $region7: #{mlp_pallas.1} parent=0 // pred_check_branch
    %13 = sbr.rel (0) target = $region9
  $region8: #{mlp_pallas.1} parent=0 // pred_region
    _
  $region9: #{mlp_pallas.1} parent=0 // pred_fallthru
    _
  // Predicated region
  $region10: #{mlp_pallas.1} parent=0 // pred_check
    _
  $region11: #{mlp_pallas.1} parent=0 // pred_check_branch
    %15 = sbr.rel (0) target = $region13
  $region12: #{mlp_pallas.1} parent=0 // pred_region
    _
  $region13: #{mlp_pallas.1} parent=0 // pred_fallthru
    _
  // Predicated region
  $region14: #{mlp_pallas.1} parent=0 // pred_check
    _
  $region15: #{mlp_pallas.1} parent=0 // pred_check_branch
    %17 = sbr.rel (0) target = $region17
  $region16: #{mlp_pallas.1} parent=0 // pred_region
    _
  $region17: #{mlp_pallas.1} parent=0 // pred_fallthru
    _
  // Predicated region
  $region18: #{mlp_pallas.1} parent=0 // pred_check
    _
  $region19: #{mlp_pallas.1} parent=0 // pred_check_branch
    %19 = sbr.rel (0) target = $region21
  $region20: #{mlp_pallas.1} parent=0 // pred_region
    _
  $region21: #{mlp_pallas.1} parent=0 // pred_fallthru
    _
  %p21 = scmp.eq.s32.totalorder 0, 0
  // Predicated region
  $region22: #{mlp_pallas.1} parent=0 // pred_check
    %p22 = pneg %p21
  $region23: #{mlp_pallas.1} parent=0 // pred_check_branch
    %24 = sbr.rel (%p22) target = $region25
  $region24: #{mlp_pallas.1} parent=0 // pred_region
    %25 = vst [vmem:[#allocation2] sm:$0xff] 0.0
    %26 = vst [vmem:[#allocation2 + $0x8] sm:$0xff] 0.0
  $region25: #{mlp_pallas.1} parent=0 // pred_fallthru
    _
  %v27 = vld [vmem:[%s0] sm:$0xff]
  %v28 = vld [vmem:[%s0 + $0x8] sm:$0xff]
  %v29 = vpack.c.bf16 %v28, %v27
  %v30 = vld [vmem:[%s1] sm:$0xf]
  %v31 = vld [vmem:[%s1 + $0x4] sm:$0xf]
  %v32 = vld [vmem:[%s1 + $0x8] sm:$0xf]
  %v33 = vld [vmem:[%s1 + $0xc] sm:$0xf]
  %v34 = vld [vmem:[%s1 + $0x10] sm:$0xf]
  %v35 = vld [vmem:[%s1 + $0x14] sm:$0xf]
  %v36 = vld [vmem:[%s1 + $0x18] sm:$0xf]
  %v37 = vld [vmem:[%s1 + $0x1c] sm:$0xf]
  %v38 = vld [vmem:[%s1 + $0x20] sm:$0xf]
  %v39 = vld [vmem:[%s1 + $0x24] sm:$0xf]
  %v40 = vld [vmem:[%s1 + $0x28] sm:$0xf]
  %v41 = vld [vmem:[%s1 + $0x2c] sm:$0xf]
  %v42 = vld [vmem:[%s1 + $0x30] sm:$0xf]
  %v43 = vld [vmem:[%s1 + $0x34] sm:$0xf]
  %v44 = vld [vmem:[%s1 + $0x38] sm:$0xf]
  %v45 = vld [vmem:[%s1 + $0x3c] sm:$0xf]
  %v46 = vld [vmem:[%s2] sm:$0x1]
  %v48 = vlaneseq
  %v49 = vshrl.u32 %v48, 7
  %v50 = vsub.s32 0, %v49
  %v51 = vrot.slane %v46, %v50
  %v69 = vunpack.c.l.b16 %v30
  %v70 = vunpack.c.l.b16 %v31
  %v71 = vunpack.c.l.b16 %v32
  %v72 = vunpack.c.l.b16 %v33
  %v73 = vunpack.c.l.b16 %v34
  %v74 = vunpack.c.l.b16 %v35
  %v75 = vunpack.c.l.b16 %v36
  %v76 = vunpack.c.l.b16 %v37
  %v77 = vunpack.c.l.b16 %v38
  %v78 = vunpack.c.l.b16 %v39
  %v79 = vunpack.c.l.b16 %v40
  %v80 = vunpack.c.l.b16 %v41
  %v81 = vunpack.c.l.b16 %v42
  %v82 = vunpack.c.l.b16 %v43
  %v83 = vunpack.c.l.b16 %v44
  %v84 = vunpack.c.l.b16 %v45
  %v85 = vpack.c.b16 %v70, %v69
  %v86 = vpack.c.b16 %v72, %v71
  %v87 = vpack.c.b16 %v74, %v73
  %v88 = vpack.c.b16 %v76, %v75
  %v89 = vpack.c.b16 %v78, %v77
  %v90 = vpack.c.b16 %v80, %v79
  %v91 = vpack.c.b16 %v82, %v81
  %v92 = vpack.c.b16 %v84, %v83
  %101 = vmatprep.subr.bf16.mxu0 0
  %102 = vmatpush1.bf16.msra.mxu0 %v85
  %103 = vmatprep.subr.bf16.mxu0 0
  %104 = vmatpush1.bf16.msra.mxu0 %v86
  %105 = vmatprep.subr.bf16.mxu0 0
  %106 = vmatpush1.bf16.msra.mxu0 %v87
  %107 = vmatprep.subr.bf16.mxu0 0
  %108 = vmatpush1.bf16.msra.mxu0 %v88
  %109 = vmatprep.subr.bf16.mxu0 0
  %110 = vmatpush1.bf16.msra.mxu0 %v89
  %111 = vmatprep.subr.bf16.mxu0 0
  %112 = vmatpush1.bf16.msra.mxu0 %v90
  %113 = vmatprep.subr.bf16.mxu0 0
  %114 = vmatpush1.bf16.msra.mxu0 %v91
  %115 = vmatprep.subr.bf16.mxu0 0
  %116 = vmatpush1.bf16.msra.mxu0 %v92
  %117 = vmatprep.subr.bf16.mxu0 0
  %118 = vmatpush1.bf16.msra.mxu0 0
  %119 = vmatprep.subr.bf16.mxu0 0
  %120 = vmatpush1.bf16.msra.mxu0 0
  %121 = vmatprep.subr.bf16.mxu0 0
  %122 = vmatpush1.bf16.msra.mxu0 0
  %123 = vmatprep.subr.bf16.mxu0 0
  %124 = vmatpush1.bf16.msra.mxu0 0
  %125 = vmatprep.subr.bf16.mxu0 0
  %126 = vmatpush1.bf16.msra.mxu0 0
  %127 = vmatprep.subr.bf16.mxu0 0
  %128 = vmatpush1.bf16.msra.mxu0 0
  %129 = vmatprep.subr.bf16.mxu0 0
  %130 = vmatpush1.bf16.msra.mxu0 0
  %131 = vmatprep.subr.bf16.mxu0 0
  %132 = vmatpush1.bf16.msra.mxu0 0
  %133 = vmatprep.mubr.bf16.mxu0 0
  %134 = vmatmul.mubr.bf16.gmra.mrb[0].mxu0 %v29
  %v135 = vpop.f32.mrb[0].mxu0
  %v136 = vadd.f32 %v51, %v135
  %v137 = vpop.f32.mrb[0].mxu0
  %v138 = vpop.f32.mrb[0].mxu0
  %v139 = vadd.f32 %v51, %v138
  %v140 = vpop.f32.mrb[0].mxu0
  %141 = vdwg.mxu0
  %v142 = vmul.f32 %v136, 0.5
  %v143 = vmul.f32 %v139, 0.5
  %v144 = vmul.f32 %v136, 0.70710677
  %v145 = vmul.f32 %v139, 0.70710677
  %v146 = verf.f32.pop %v144
  %v147 = verf.f32.pop %v145
  %v148 = vadd.f32 %v146, 1.0
  %v149 = vadd.f32 %v147, 1.0
  %v150 = vmul.f32 %v142, %v148
  %v151 = vmul.f32 %v143, %v149
  %v152 = vld [vmem:[#allocation2] sm:$0xff]
  %v153 = vld [vmem:[#allocation2 + $0x8] sm:$0xff]
  %v154 = vpack.c.bf16 %v151, %v150
  %v155 = vld [vmem:[%s3] sm:$0xf]
  %v156 = vld [vmem:[%s3 + $0x4] sm:$0xf]
  %v157 = vld [vmem:[%s3 + $0x8] sm:$0xf]
  %v158 = vld [vmem:[%s3 + $0xc] sm:$0xf]
  %v159 = vld [vmem:[%s3 + $0x10] sm:$0xf]
  %v160 = vld [vmem:[%s3 + $0x14] sm:$0xf]
  %v161 = vld [vmem:[%s3 + $0x18] sm:$0xf]
  %v162 = vld [vmem:[%s3 + $0x1c] sm:$0xf]
  %v163 = vld [vmem:[%s3 + $0x20] sm:$0xf]
  %v164 = vld [vmem:[%s3 + $0x24] sm:$0xf]
  %v165 = vld [vmem:[%s3 + $0x28] sm:$0xf]
  %v166 = vld [vmem:[%s3 + $0x2c] sm:$0xf]
  %v167 = vld [vmem:[%s3 + $0x30] sm:$0xf]
  %v168 = vld [vmem:[%s3 + $0x34] sm:$0xf]
  %v169 = vld [vmem:[%s3 + $0x38] sm:$0xf]
  %v170 = vld [vmem:[%s3 + $0x3c] sm:$0xf]
  %v187 = vunpack.c.l.b16 %v155
  %v188 = vunpack.c.l.b16 %v156
  %v189 = vunpack.c.l.b16 %v157
  %v190 = vunpack.c.l.b16 %v158
  %v191 = vunpack.c.l.b16 %v159
  %v192 = vunpack.c.l.b16 %v160
  %v193 = vunpack.c.l.b16 %v161
  %v194 = vunpack.c.l.b16 %v162
  %v195 = vunpack.c.l.b16 %v163
  %v196 = vunpack.c.l.b16 %v164
  %v197 = vunpack.c.l.b16 %v165
  %v198 = vunpack.c.l.b16 %v166
  %v199 = vunpack.c.l.b16 %v167
  %v200 = vunpack.c.l.b16 %v168
  %v201 = vunpack.c.l.b16 %v169
  %v202 = vunpack.c.l.b16 %v170
  %v203 = vpack.c.b16 %v188, %v187
  %v204 = vpack.c.b16 %v190, %v189
  %v205 = vpack.c.b16 %v192, %v191
  %v206 = vpack.c.b16 %v194, %v193
  %v207 = vpack.c.b16 %v196, %v195
  %v208 = vpack.c.b16 %v198, %v197
  %v209 = vpack.c.b16 %v200, %v199
  %v210 = vpack.c.b16 %v202, %v201
  %219 = vmatprep.subr.bf16.mxu0 0
  %220 = vmatpush1.bf16.msra.mxu0 %v203
  %221 = vmatprep.subr.bf16.mxu0 0
  %222 = vmatpush1.bf16.msra.mxu0 %v204
  %223 = vmatprep.subr.bf16.mxu0 0
  %224 = vmatpush1.bf16.msra.mxu0 %v205
  %225 = vmatprep.subr.bf16.mxu0 0
  %226 = vmatpush1.bf16.msra.mxu0 %v206
  %227 = vmatprep.subr.bf16.mxu0 0
  %228 = vmatpush1.bf16.msra.mxu0 %v207
  %229 = vmatprep.subr.bf16.mxu0 0
  %230 = vmatpush1.bf16.msra.mxu0 %v208
  %231 = vmatprep.subr.bf16.mxu0 0
  %232 = vmatpush1.bf16.msra.mxu0 %v209
  %233 = vmatprep.subr.bf16.mxu0 0
  %234 = vmatpush1.bf16.msra.mxu0 %v210
  %235 = vmatprep.subr.bf16.mxu0 0
  %236 = vmatpush1.bf16.msra.mxu0 0
  %237 = vmatprep.subr.bf16.mxu0 0
  %238 = vmatpush1.bf16.msra.mxu0 0
  %239 = vmatprep.subr.bf16.mxu0 0
  %240 = vmatpush1.bf16.msra.mxu0 0
  %241 = vmatprep.subr.bf16.mxu0 0
  %242 = vmatpush1.bf16.msra.mxu0 0
  %243 = vmatprep.subr.bf16.mxu0 0
  %244 = vmatpush1.bf16.msra.mxu0 0
  %245 = vmatprep.subr.bf16.mxu0 0
  %246 = vmatpush1.bf16.msra.mxu0 0
  %247 = vmatprep.subr.bf16.mxu0 0
  %248 = vmatpush1.bf16.msra.mxu0 0
  %249 = vmatprep.subr.bf16.mxu0 0
  %250 = vmatpush1.bf16.msra.mxu0 0
  %251 = vmatprep.mubr.bf16.mxu0 0
  %252 = vmatmul.mubr.bf16.gmra.mrb[0].mxu0 %v154
  %v253 = vpop.f32.mrb[0].mxu0
  %v254 = vadd.f32 0.0, %v253
  %v255 = vpop.f32.mrb[0].mxu0
  %v256 = vpop.f32.mrb[0].mxu0
  %v257 = vadd.f32 0.0, %v256
  %v258 = vpop.f32.mrb[0].mxu0
  %259 = vdwg.mxu0
  %v260 = vadd.f32 %v152, %v254
  %v261 = vadd.f32 %v153, %v257
  %262 = vst [vmem:[#allocation2] sm:$0xff] %v260
  %263 = vst [vmem:[#allocation2 + $0x8] sm:$0xff] %v261
  // Predicated region
  $region26: #{mlp_pallas.1} parent=0 // pred_check
    %p264 = pneg %p21
  $region27: #{mlp_pallas.1} parent=0 // pred_check_branch
    %266 = sbr.rel (%p264) target = $region29
  $region28: #{mlp_pallas.1} parent=0 // pred_region
    %v267 = vld [vmem:[#allocation2] sm:$0xff]
    %v268 = vld [vmem:[#allocation2 + $0x8] sm:$0xff]
    %v269 = vld [vmem:[%s4] sm:$0x1]
    %v271 = vlaneseq
    %v272 = vshrl.u32 %v271, 7
    %v273 = vsub.s32 0, %v272
    %v274 = vrot.slane %v269, %v273
    %v276 = vadd.f32 %v267, %v274
    %v277 = vadd.f32 %v268, %v274
    %278 = vst [vmem:[%s5] sm:$0xff] %v276
    %279 = vst [vmem:[%s5 + $0x8] sm:$0xff] %v277
  $region29: #{mlp_pallas.1} parent=0 // pred_fallthru
    _
  // Predicated region
  $region30: #{mlp_pallas.1} parent=0 // pred_check
    _
  $region31: #{mlp_pallas.1} parent=0 // pred_check_branch
    %281 = sbr.rel (0) target = $region33
  $region32: #{mlp_pallas.1} parent=0 // pred_region
    _
  $region33: #{mlp_pallas.1} parent=0 // pred_fallthru
    _
  // Predicated region
  $region34: #{mlp_pallas.1} parent=0 // pred_check
    _
  $region35: #{mlp_pallas.1} parent=0 // pred_check_branch
    %283 = sbr.rel (0) target = $region37
  $region36: #{mlp_pallas.1} parent=0 // pred_region
    _
  $region37: #{mlp_pallas.1} parent=0 // pred_fallthru
    _

</llo_original>
